<compile_context>
chip_gen: v6e
topology: v6e:2x2x1
jax: 0.10.0
libtpu: 0.0.40
codegen_flags: <defaults>
</compile_context>

<pallas_src>
import functools

import jax
import jax.numpy as jnp
import numpy as np
from jax.experimental import pallas as pl
from jax.experimental.pallas import tpu as pltpu


def _channel_attention_kernel(x_ref, w1_ref, b1_ref, w2_ref, b2_ref,
                              w3_ref, b3_ref, o_ref, *, inv_hw):
    # x_ref block: (BT, Cg, HWp) float32 -- BT (folded) samples per grid step.
    x = x_ref[...]

    # AvgSpatial: padded lanes are zero, so divide by the TRUE H*W.
    pooled = jnp.sum(x, axis=-1) * inv_hw                 # (BT, Cg)
    identity = pooled

    # TripleConv on a 1x1 map (BatchNorm skipped, see header).  Weights are
    # pre-transposed (and block-diagonal when batch is folded into sublanes),
    # so each stage is a batched (BT, Cg) @ (Cg, Cg) matmul + bias.
    y = jnp.dot(pooled, w1_ref[...],
                preferred_element_type=jnp.float32) + b1_ref[...]
    y = jnp.maximum(y, 0.0) + identity

    y = jnp.dot(y, w2_ref[...],
                preferred_element_type=jnp.float32) + b2_ref[...]
    y = jnp.maximum(y, 0.0) + identity

    y = jnp.dot(y, w3_ref[...],
                preferred_element_type=jnp.float32) + b3_ref[...]
    y = jnp.maximum(y, 0.0)

    # Sigmoid gate, broadcast over spatial, fused multiply + single store.
    att = jax.nn.sigmoid(y)                               # (BT, Cg)
    o_ref[...] = (att[:, :, None] * x).astype(o_ref.dtype)


def _round_up(a, m):
    return ((a + m - 1) // m) * m


def channel_attention(x_nchw, params, *, target_block_bytes=4 << 20):
    """x_nchw: (B, C, H, W) float32. params: dict of w1,b1,w2,b2,w3,b3."""
    B, C, H, W = x_nchw.shape
    HW = H * W
    HWp = _round_up(HW, 128)                  # lane-dense spatial axis

    # Fold G samples into the sublane (channel) axis when C under-fills the
    # 8-row f32 sublane tile.
    if C < 8 and 8 % C == 0:
        G = 8 // C
    else:
        G = 1
    Cg = G * C

    Bf = -(-B // G)                           # folded batch (logical)
    per_block_bytes = Cg * HWp * 4
    bt_budget = max(1, target_block_bytes // per_block_bytes)
    if Bf >= 2:
        # Keep at least 2 grid steps so megacore (v7x) can split the grid.
        BT = int(max(1, min(bt_budget, -(-Bf // 2))))
    else:
        BT = 1
    Bf_pad = _round_up(Bf, BT)
    B_pad = Bf_pad * G
    grid_b = Bf_pad // BT

    # ---- wrapper-side layout plumbing -------------------------------------
    x = x_nchw.reshape(B, C, HW)
    pad_b, pad_hw = B_pad - B, HWp - HW
    if pad_b or pad_hw:
        x = jnp.pad(x, ((0, pad_b), (0, 0), (0, pad_hw)))
    x = x.reshape(Bf_pad, Cg, HWp)

    f32 = jnp.float32
    eye = jnp.eye(G, dtype=f32)
    # Block-diagonal, pre-transposed 1x1-conv weights: kron(I_G, W.T), so
    # y[g*C + co] = sum_ci pooled[g*C + ci] * W[co, ci]  (per-sample mixing).
    w1 = jnp.kron(eye, params["w1"].astype(f32).T)        # (Cg, Cg)
    w2 = jnp.kron(eye, params["w2"].astype(f32).T)
    w3 = jnp.kron(eye, params["w3"].astype(f32).T)
    b1 = jnp.tile(params["b1"].astype(f32), G).reshape(1, Cg)
    b2 = jnp.tile(params["b2"].astype(f32), G).reshape(1, Cg)
    b3 = jnp.tile(params["b3"].astype(f32), G).reshape(1, Cg)

    kernel = functools.partial(_channel_attention_kernel, inv_hw=1.0 / HW)

    out = pl.pallas_call(
        kernel,
        out_shape=jax.ShapeDtypeStruct((Bf_pad, Cg, HWp), x.dtype),
        grid_spec=pltpu.PrefetchScalarGridSpec(
            num_scalar_prefetch=0,
            grid=(grid_b,),
            in_specs=[
                pl.BlockSpec((BT, Cg, HWp), lambda b: (b, 0, 0)),   # x slab
                pl.BlockSpec((Cg, Cg), lambda b: (0, 0)),           # w1 (bd, T)
                pl.BlockSpec((1, Cg), lambda b: (0, 0)),            # b1
                pl.BlockSpec((Cg, Cg), lambda b: (0, 0)),           # w2
                pl.BlockSpec((1, Cg), lambda b: (0, 0)),            # b2
                pl.BlockSpec((Cg, Cg), lambda b: (0, 0)),           # w3
                pl.BlockSpec((1, Cg), lambda b: (0, 0)),            # b3
            ],
            out_specs=pl.BlockSpec((BT, Cg, HWp), lambda b: (b, 0, 0)),
        ),
        compiler_params=pltpu.CompilerParams(
            dimension_semantics=("parallel",),
            # ~4 buffers of <=4 MiB (double-buffered in + out) + tiny weights.
            vmem_limit_bytes=32 * 1024 * 1024,
        ),
    )(x, w1, b1, w2, b2, w3, b3)

    # Undo folding / padding.
    out = out.reshape(Bf_pad * G, C, HWp)[:B, :, :HW]
    return out.reshape(B, C, H, W)


def _reference(x_nchw, params):
    """Pure-JAX reference for sanity checking (BN skipped on the 1x1 map)."""
    pooled = jnp.mean(x_nchw, axis=(2, 3))                       # (B, C)
    ident = pooled
    y = jnp.maximum(pooled @ params["w1"].T + params["b1"], 0.0) + ident
    y = jnp.maximum(y @ params["w2"].T + params["b2"], 0.0) + ident
    y = jnp.maximum(y @ params["w3"].T + params["b3"], 0.0)
    att = jax.nn.sigmoid(y)[:, :, None, None]
    return att * x_nchw


if __name__ == "__main__":
    B, C, H, W = 2, 4, 16, 16
    key = jax.random.PRNGKey(0)
    kx, k1, k2, k3, kb1, kb2, kb3 = jax.random.split(key, 7)

    x = jax.random.normal(kx, (B, C, H, W), dtype=jnp.float32)

    # 1x1 conv weights are (C_out, C_in).
    scale = 1.0 / np.sqrt(C)
    params = {
        "w1": jax.random.uniform(k1, (C, C), jnp.float32, -scale, scale),
        "b1": jax.random.uniform(kb1, (C,), jnp.float32, -scale, scale),
        "w2": jax.random.uniform(k2, (C, C), jnp.float32, -scale, scale),
        "b2": jax.random.uniform(kb2, (C,), jnp.float32, -scale, scale),
        "w3": jax.random.uniform(k3, (C, C), jnp.float32, -scale, scale),
        "b3": jax.random.uniform(kb3, (C,), jnp.float32, -scale, scale),
    }

    out = channel_attention(x, params)
    out = jax.block_until_ready(out)

    ref = _reference(x, params)
    np.testing.assert_allclose(np.asarray(out), np.asarray(ref),
                               rtol=1e-5, atol=1e-5)
    print("KERNEL_OK")
</pallas_src>

<mosaic_0001>
module attributes {stable_mosaic.version = 11 : i64} {
  func.func @_channel_attention_kernel(%arg0: i32, %arg1: memref<1x8x256xf32, #tpu.memory_space<vmem>>, %arg2: memref<8x8xf32, #tpu.memory_space<vmem>>, %arg3: memref<1x8xf32, #tpu.memory_space<vmem>>, %arg4: memref<8x8xf32, #tpu.memory_space<vmem>>, %arg5: memref<1x8xf32, #tpu.memory_space<vmem>>, %arg6: memref<8x8xf32, #tpu.memory_space<vmem>>, %arg7: memref<1x8xf32, #tpu.memory_space<vmem>>, %arg8: memref<1x8x256xf32, #tpu.memory_space<vmem>>) attributes {dimension_semantics = [#tpu.dimension_semantics<parallel>], iteration_bounds = array<i64: 1>, scalar_prefetch = 0 : i64, scratch_operands = 0 : i64, tpu.core_type = #tpu.core_type<tc>, window_params = [{transform_indices = @transform_0, window_bounds = array<i64: 1, 8, 256>}, {pipeline_mode = #tpu.pipeline_mode<synchronous>, transform_indices = @transform_1, window_bounds = array<i64: 8, 8>}, {pipeline_mode = #tpu.pipeline_mode<synchronous>, transform_indices = @transform_2, window_bounds = array<i64: 1, 8>}, {pipeline_mode = #tpu.pipeline_mode<synchronous>, transform_indices = @transform_3, window_bounds = array<i64: 8, 8>}, {pipeline_mode = #tpu.pipeline_mode<synchronous>, transform_indices = @transform_4, window_bounds = array<i64: 1, 8>}, {pipeline_mode = #tpu.pipeline_mode<synchronous>, transform_indices = @transform_5, window_bounds = array<i64: 8, 8>}, {pipeline_mode = #tpu.pipeline_mode<synchronous>, transform_indices = @transform_6, window_bounds = array<i64: 1, 8>}, {transform_indices = @transform_7, window_bounds = array<i64: 1, 8, 256>}]} {
    %c0 = arith.constant 0 : index
    %c0_0 = arith.constant 0 : index
    %c0_1 = arith.constant 0 : index
    %0 = vector.load %arg1[%c0, %c0_0, %c0_1] : memref<1x8x256xf32, #tpu.memory_space<vmem>>, vector<1x8x256xf32>
    %cst = arith.constant dense<0.000000e+00> : vector<1x8xf32>
    %1 = vector.multi_reduction <add>, %0, %cst [2] : vector<1x8x256xf32> to vector<1x8xf32>
    %cst_2 = arith.constant 3.906250e-03 : f32
    %2 = vector.broadcast %cst_2 : f32 to vector<1x8xf32>
    %3 = arith.mulf %1, %2 : vector<1x8xf32>
    %c0_3 = arith.constant 0 : index
    %c0_4 = arith.constant 0 : index
    %4 = vector.load %arg2[%c0_3, %c0_4] : memref<8x8xf32, #tpu.memory_space<vmem>>, vector<8x8xf32>
    %cst_5 = arith.constant dense<0.000000e+00> : vector<1x8xf32>
    %5 = tpu.matmul %3, %4, %cst_5 {dimension_numbers = #tpu.dot_dimension_numbers<[1], [0], [0], [1], [0, 0, 1, 1], [], []>} : vector<1x8xf32>, vector<8x8xf32>, vector<1x8xf32> -> vector<1x8xf32>
    %c0_6 = arith.constant 0 : index
    %c0_7 = arith.constant 0 : index
    %6 = vector.load %arg3[%c0_6, %c0_7] : memref<1x8xf32, #tpu.memory_space<vmem>>, vector<1x8xf32>
    %7 = arith.addf %5, %6 : vector<1x8xf32>
    %cst_8 = arith.constant 0.000000e+00 : f32
    %8 = vector.broadcast %cst_8 : f32 to vector<1x8xf32>
    %9 = arith.maximumf %7, %8 : vector<1x8xf32>
    %10 = arith.addf %9, %3 : vector<1x8xf32>
    %c0_9 = arith.constant 0 : index
    %c0_10 = arith.constant 0 : index
    %11 = vector.load %arg4[%c0_9, %c0_10] : memref<8x8xf32, #tpu.memory_space<vmem>>, vector<8x8xf32>
    %cst_11 = arith.constant dense<0.000000e+00> : vector<1x8xf32>
    %12 = tpu.matmul %10, %11, %cst_11 {dimension_numbers = #tpu.dot_dimension_numbers<[1], [0], [0], [1], [0, 0, 1, 1], [], []>} : vector<1x8xf32>, vector<8x8xf32>, vector<1x8xf32> -> vector<1x8xf32>
    %c0_12 = arith.constant 0 : index
    %c0_13 = arith.constant 0 : index
    %13 = vector.load %arg5[%c0_12, %c0_13] : memref<1x8xf32, #tpu.memory_space<vmem>>, vector<1x8xf32>
    %14 = arith.addf %12, %13 : vector<1x8xf32>
    %cst_14 = arith.constant 0.000000e+00 : f32
    %15 = vector.broadcast %cst_14 : f32 to vector<1x8xf32>
    %16 = arith.maximumf %14, %15 : vector<1x8xf32>
    %17 = arith.addf %16, %3 : vector<1x8xf32>
    %c0_15 = arith.constant 0 : index
    %c0_16 = arith.constant 0 : index
    %18 = vector.load %arg6[%c0_15, %c0_16] : memref<8x8xf32, #tpu.memory_space<vmem>>, vector<8x8xf32>
    %cst_17 = arith.constant dense<0.000000e+00> : vector<1x8xf32>
    %19 = tpu.matmul %17, %18, %cst_17 {dimension_numbers = #tpu.dot_dimension_numbers<[1], [0], [0], [1], [0, 0, 1, 1], [], []>} : vector<1x8xf32>, vector<8x8xf32>, vector<1x8xf32> -> vector<1x8xf32>
    %c0_18 = arith.constant 0 : index
    %c0_19 = arith.constant 0 : index
    %20 = vector.load %arg7[%c0_18, %c0_19] : memref<1x8xf32, #tpu.memory_space<vmem>>, vector<1x8xf32>
    %21 = arith.addf %19, %20 : vector<1x8xf32>
    %cst_20 = arith.constant 0.000000e+00 : f32
    %22 = vector.broadcast %cst_20 : f32 to vector<1x8xf32>
    %23 = arith.maximumf %21, %22 : vector<1x8xf32>
    %24 = arith.negf %23 : vector<1x8xf32>
    %25 = math.exp %24 : vector<1x8xf32>
    %cst_21 = arith.constant 1.000000e+00 : f32
    %26 = vector.broadcast %cst_21 : f32 to vector<1x8xf32>
    %27 = arith.addf %26, %25 : vector<1x8xf32>
    %28 = arith.divf %26, %27 : vector<1x8xf32>
    %29 = vector.shape_cast %28 : vector<1x8xf32> to vector<1x8x1xf32>
    %30 = vector.broadcast %29 : vector<1x8x1xf32> to vector<1x8x256xf32>
    %31 = arith.mulf %30, %0 : vector<1x8x256xf32>
    %c0_22 = arith.constant 0 : index
    %c0_23 = arith.constant 0 : index
    %c0_24 = arith.constant 0 : index
    %32 = vector.load %arg8[%c0_22, %c0_23, %c0_24] : memref<1x8x256xf32, #tpu.memory_space<vmem>>, vector<1x8x256xf32>
    tpu.vector_store %arg8[%c0_22, %c0_23, %c0_24], %31 {strides = array<i32>} : memref<1x8x256xf32, #tpu.memory_space<vmem>>, vector<1x8x256xf32>,
    return
  }
  func.func @transform_0(%arg0: i32) -> (i32, i32, i32) {
    %c0_i32 = arith.constant 0 : i32
    %c0_i32_0 = arith.constant 0 : i32
    %c0_i32_1 = arith.constant 0 : i32
    return %arg0, %c0_i32, %c0_i32_0 : i32, i32, i32
  }
  func.func @transform_1(%arg0: i32) -> (i32, i32) {
    %c0_i32 = arith.constant 0 : i32
    %c0_i32_0 = arith.constant 0 : i32
    %c0_i32_1 = arith.constant 0 : i32
    return %c0_i32, %c0_i32_0 : i32, i32
  }
  func.func @transform_2(%arg0: i32) -> (i32, i32) {
    %c0_i32 = arith.constant 0 : i32
    %c0_i32_0 = arith.constant 0 : i32
    %c0_i32_1 = arith.constant 0 : i32
    return %c0_i32, %c0_i32_0 : i32, i32
  }
  func.func @transform_3(%arg0: i32) -> (i32, i32) {
    %c0_i32 = arith.constant 0 : i32
    %c0_i32_0 = arith.constant 0 : i32
    %c0_i32_1 = arith.constant 0 : i32
    return %c0_i32, %c0_i32_0 : i32, i32
  }
  func.func @transform_4(%arg0: i32) -> (i32, i32) {
    %c0_i32 = arith.constant 0 : i32
    %c0_i32_0 = arith.constant 0 : i32
    %c0_i32_1 = arith.constant 0 : i32
    return %c0_i32, %c0_i32_0 : i32, i32
  }
  func.func @transform_5(%arg0: i32) -> (i32, i32) {
    %c0_i32 = arith.constant 0 : i32
    %c0_i32_0 = arith.constant 0 : i32
    %c0_i32_1 = arith.constant 0 : i32
    return %c0_i32, %c0_i32_0 : i32, i32
  }
  func.func @transform_6(%arg0: i32) -> (i32, i32) {
    %c0_i32 = arith.constant 0 : i32
    %c0_i32_0 = arith.constant 0 : i32
    %c0_i32_1 = arith.constant 0 : i32
    return %c0_i32, %c0_i32_0 : i32, i32
  }
  func.func @transform_7(%arg0: i32) -> (i32, i32, i32) {
    %c0_i32 = arith.constant 0 : i32
    %c0_i32_0 = arith.constant 0 : i32
    %c0_i32_1 = arith.constant 0 : i32
    return %arg0, %c0_i32, %c0_i32_0 : i32, i32, i32
  }
}

</mosaic_0001>

<llo_original>
// kernel: tpu_custom_call.1
$region0: #{tpu_custom_call.1}
  #allocation0 [shape = 'u32[]', space=smem, size = 0x4, offset = 0x4, fixed_abs, tag = 'smem constant byte address 0x4 - core index']
  #allocation1 [shape = 'u32[144,128]{1,0:T(1,128)}', space=vmem, size = 0x12000, scoped, tag = 'internal scratch']
  %s0 = inlined_call_operand.hbm [shape: f32[1,8,256], index: 0, kind: input, shape index: {}]
  %s1 = inlined_call_operand.hbm [shape: f32[8,8], index: 1, kind: input, shape index: {}]
  %s2 = inlined_call_operand.vmem [shape: f32[1,8], index: 2, kind: input, shape index: {}]
  %s3 = inlined_call_operand.hbm [shape: f32[8,8], index: 3, kind: input, shape index: {}]
  %s4 = inlined_call_operand.hbm [shape: f32[1,8], index: 4, kind: input, shape index: {}]
  %s5 = inlined_call_operand.vmem [shape: f32[8,8], index: 5, kind: input, shape index: {}]
  %s6 = inlined_call_operand.vmem [shape: f32[1,8], index: 6, kind: input, shape index: {}]
  %s7 = inlined_call_operand.hbm [shape: f32[1,8,256], index: 7, kind: output, shape index: {}]
  %s8 = sld [smem:[#allocation0]]
  $region54: #{tpu_custom_call.1} parent=0
    _
  %s10 = ssub.s32 1, %s8
  %s11 = scalar_select 0, %s10, %s8
  $region1: #{tpu_custom_call.1} parent=0
    #allocation2 [shape = 'u8[8192]{0}', space=vmem, size = 0x2000, scoped, tag = 'input window, operand 0, single buffered']
    #allocation3 [shape = 's32[1]{0}', space=sflag, size = 0x4, scoped, tag = 'scoped memory for tpu_custom_call.1']
    #allocation4 [shape = 's32[1]{0}', space=sflag, size = 0x4, scoped, tag = 'scoped memory for tpu_custom_call.1']
    #allocation5 [shape = 'u8[4096]{0}', space=vmem, size = 0x1000, scoped, tag = 'input window, operand 1, single buffered']
    #allocation6 [shape = 's32[1]{0}', space=sflag, size = 0x4, scoped, tag = 'scoped memory for tpu_custom_call.1']
    #allocation7 [shape = 'u8[4096]{0}', space=vmem, size = 0x1000, scoped, tag = 'input window, operand 3, single buffered']
    #allocation8 [shape = 'u8[512]{0}', space=vmem, size = 0x400, scoped, tag = 'input window, operand 4, single buffered']
    #allocation9 [shape = 's32[1]{0}', space=sflag, size = 0x4, scoped, tag = 'scoped memory for tpu_custom_call.1']
    #allocation10 [shape = 'u8[8192]{0}', space=vmem, size = 0x2000, scoped, tag = 'output window, operand 0, single buffered']
    %12 = vsyncpa [#allocation3], 0
    %13 = vsyncpa [#allocation6], 0
    %14 = vsyncpa [#allocation9], 0
    %15 = vsyncpa [#allocation4], 0
    // Predicated region
    $region2: #{tpu_custom_call.1} parent=1 // pred_check
      _
    $region3: #{tpu_custom_call.1} parent=1 // pred_check_branch
      %17 = sbr.rel (0) target = $region5
    $region4: #{tpu_custom_call.1} parent=1 // pred_region
      %s19 = ssub.s32 256, 256
      %20 = vsyncadd [#allocation3], %s19
      %s22 = sshll.u32 [#allocation2], 4
      %s23 = int_to_ptr.vmem [resolvable:$true] %s22
      %25 = dma.hbm_to_vmem [thread:$0]  %s0, 256, %s23, [#allocation3]
    $region5: #{tpu_custom_call.1} parent=1 // pred_fallthru
      _
    // Predicated region
    $region6: #{tpu_custom_call.1} parent=1 // pred_check
      _
    $region7: #{tpu_custom_call.1} parent=1 // pred_check_branch
      %27 = sbr.rel (0) target = $region9
    $region8: #{tpu_custom_call.1} parent=1 // pred_region
      %s29 = ssub.s32 128, 128
      %30 = vsyncadd [#allocation6], %s29
      %s32 = sshll.u32 [#allocation5], 4
      %s33 = int_to_ptr.vmem [resolvable:$true] %s32
      %35 = dma.hbm_to_vmem [thread:$0]  %s1, 128, %s33, [#allocation6]
    $region9: #{tpu_custom_call.1} parent=1 // pred_fallthru
      _
    // Predicated region
    $region10: #{tpu_custom_call.1} parent=1 // pred_check
      _
    $region11: #{tpu_custom_call.1} parent=1 // pred_check_branch
      %37 = sbr.rel (0) target = $region13
    $region12: #{tpu_custom_call.1} parent=1 // pred_region
      _
    $region13: #{tpu_custom_call.1} parent=1 // pred_fallthru
      _
    // Predicated region
    $region14: #{tpu_custom_call.1} parent=1 // pred_check
      _
    $region15: #{tpu_custom_call.1} parent=1 // pred_check_branch
      %39 = sbr.rel (0) target = $region17
    $region16: #{tpu_custom_call.1} parent=1 // pred_region
      %s41 = ssub.s32 128, 128
      %42 = vsyncadd [#allocation6], %s41
      %s44 = sshll.u32 [#allocation7], 4
      %s45 = int_to_ptr.vmem [resolvable:$true] %s44
      %47 = dma.hbm_to_vmem [thread:$0]  %s3, 128, %s45, [#allocation6]
    $region17: #{tpu_custom_call.1} parent=1 // pred_fallthru
      _
    // Predicated region
    $region18: #{tpu_custom_call.1} parent=1 // pred_check
      _
    $region19: #{tpu_custom_call.1} parent=1 // pred_check_branch
      %49 = sbr.rel (0) target = $region21
    $region20: #{tpu_custom_call.1} parent=1 // pred_region
      %s51 = ssub.s32 16, 16
      %52 = vsyncadd [#allocation9], %s51
      %s54 = sshll.u32 [#allocation8], 4
      %s55 = int_to_ptr.vmem [resolvable:$true] %s54
      %57 = dma.hbm_to_vmem [thread:$0]  %s4, 16, %s55, [#allocation9]
    $region21: #{tpu_custom_call.1} parent=1 // pred_fallthru
      _
    // Predicated region
    $region22: #{tpu_custom_call.1} parent=1 // pred_check
      _
    $region23: #{tpu_custom_call.1} parent=1 // pred_check_branch
      %59 = sbr.rel (0) target = $region25
    $region24: #{tpu_custom_call.1} parent=1 // pred_region
      _
    $region25: #{tpu_custom_call.1} parent=1 // pred_fallthru
      _
    // Predicated region
    $region26: #{tpu_custom_call.1} parent=1 // pred_check
      _
    $region27: #{tpu_custom_call.1} parent=1 // pred_check_branch
      %61 = sbr.rel (0) target = $region29
    $region28: #{tpu_custom_call.1} parent=1 // pred_region
      _
    $region29: #{tpu_custom_call.1} parent=1 // pred_fallthru
      _
    // Predicated region
    $region30: #{tpu_custom_call.1} parent=1 // pred_check
      _
    $region31: #{tpu_custom_call.1} parent=1 // pred_check_branch
      %63 = sbr.rel (0) target = $region33
    $region32: #{tpu_custom_call.1} parent=1 // pred_region
      %64 = dma.done [#allocation3], 256
    $region33: #{tpu_custom_call.1} parent=1 // pred_fallthru
      _
    // Predicated region
    $region34: #{tpu_custom_call.1} parent=1 // pred_check
      _
    $region35: #{tpu_custom_call.1} parent=1 // pred_check_branch
      %66 = sbr.rel (0) target = $region37
    $region36: #{tpu_custom_call.1} parent=1 // pred_region
      %67 = dma.done [#allocation6], 128
    $region37: #{tpu_custom_call.1} parent=1 // pred_fallthru
      _
    // Predicated region
    $region38: #{tpu_custom_call.1} parent=1 // pred_check
      _
    $region39: #{tpu_custom_call.1} parent=1 // pred_check_branch
      %69 = sbr.rel (0) target = $region41
    $region40: #{tpu_custom_call.1} parent=1 // pred_region
      %70 = dma.done [#allocation6], 128
    $region41: #{tpu_custom_call.1} parent=1 // pred_fallthru
      _
    // Predicated region
    $region42: #{tpu_custom_call.1} parent=1 // pred_check
      _
    $region43: #{tpu_custom_call.1} parent=1 // pred_check_branch
      %72 = sbr.rel (0) target = $region45
    $region44: #{tpu_custom_call.1} parent=1 // pred_region
      %73 = dma.done [#allocation9], 16
    $region45: #{tpu_custom_call.1} parent=1 // pred_fallthru
      _
    %v74 = vld [vmem:[#allocation2] sm:$0xff]
    %v75 = vld [vmem:[#allocation2 + $0x8] sm:$0xff]
    %v76 = vadd.f32 %v74, %v75
    %77 = vadd.xlane.f32.xlu0 %v76
    %v78 = vpop.xlane.xlu0 %77
    %v79 = vmul.f32 %v78, 0.00390625
    %v80 = vld [vmem:[#allocation5] sm:$0xff]
    %v81 = vld [vmem:[%s2] sm:$0x1]
    %v83 = vlaneseq
    %v84 = vand.u32 %v83, 127
    %v85 = vlaneseq
    %v86 = vshrl.u32 %v85, 7
    %v87 = vsub.s32 %v84, %v86
    %v88 = vrot.slane %v79, %v87
    %vm89 = vcmask 64512
    %v90 = vsel %vm89, %v88, 0
    %92 = vmatprep.subr.mxu0 0.0
    %93 = vmatpush1.msra.mxu0 0.0
    %94 = vmatprep.subr.mxu0 0.0
    %95 = vmatpush1.msra.mxu0 0.0
    %96 = vmatprep.subr.mxu0 0.0
    %97 = vmatpush1.msra.mxu0 0.0
    %98 = vmatprep.subr.mxu0 0.0
    %99 = vmatpush1.msra.mxu0 0.0
    %100 = vmatprep.subr.mxu0 0.0
    %101 = vmatpush1.msra.mxu0 0.0
    %102 = vmatprep.subr.mxu0 0.0
    %103 = vmatpush1.msra.mxu0 0.0
    %104 = vmatprep.subr.mxu0 0.0
    %105 = vmatpush1.msra.mxu0 0.0
    %106 = vmatprep.subr.mxu0 0.0
    %107 = vmatpush1.msra.mxu0 0.0
    %108 = vmatprep.subr.mxu0 0.0
    %109 = vmatpush1.msra.mxu0 0.0
    %110 = vmatprep.subr.mxu0 0.0
    %111 = vmatpush1.msra.mxu0 0.0
    %112 = vmatprep.subr.mxu0 0.0
    %113 = vmatpush1.msra.mxu0 0.0
    %114 = vmatprep.subr.mxu0 0.0
    %115 = vmatpush1.msra.mxu0 0.0
    %116 = vmatprep.subr.mxu0 0.0
    %117 = vmatpush1.msra.mxu0 0.0
    %118 = vmatprep.subr.mxu0 0.0
    %119 = vmatpush1.msra.mxu0 0.0
    %120 = vmatprep.subr.mxu0 0.0
    %121 = vmatpush1.msra.mxu0 0.0
    %122 = vmatprep.subr.mxu0 0.0
    %123 = vmatpush1.msra.mxu0 %v80
    %124 = vmatprep.subr.mxu0 0.0
    %125 = vmatpush2.msra.mxu0 0.0
    %126 = vmatprep.subr.mxu0 0.0
    %127 = vmatpush2.msra.mxu0 0.0
    %128 = vmatprep.subr.mxu0 0.0
    %129 = vmatpush2.msra.mxu0 0.0
    %130 = vmatprep.subr.mxu0 0.0
    %131 = vmatpush2.msra.mxu0 0.0
    %132 = vmatprep.subr.mxu0 0.0
    %133 = vmatpush2.msra.mxu0 0.0
    %134 = vmatprep.subr.mxu0 0.0
    %135 = vmatpush2.msra.mxu0 0.0
    %136 = vmatprep.subr.mxu0 0.0
    %137 = vmatpush2.msra.mxu0 0.0
    %138 = vmatprep.subr.mxu0 0.0
    %139 = vmatpush2.msra.mxu0 0.0
    %140 = vmatprep.subr.mxu0 0.0
    %141 = vmatpush2.msra.mxu0 0.0
    %142 = vmatprep.subr.mxu0 0.0
    %143 = vmatpush2.msra.mxu0 0.0
    %144 = vmatprep.subr.mxu0 0.0
    %145 = vmatpush2.msra.mxu0 0.0
    %146 = vmatprep.subr.mxu0 0.0
    %147 = vmatpush2.msra.mxu0 0.0
    %148 = vmatprep.subr.mxu0 0.0
    %149 = vmatpush2.msra.mxu0 0.0
    %150 = vmatprep.subr.mxu0 0.0
    %151 = vmatpush2.msra.mxu0 0.0
    %152 = vmatprep.subr.mxu0 0.0
    %153 = vmatpush2.msra.mxu0 0.0
    %154 = vmatprep.subr.mxu0 0.0
    %155 = vmatpush2.msra.mxu0 0.0
    %156 = vmatprep.mubr.f32.mxu0 0.0
    %157 = vmatmul.mubr.f32.gmra.mxu0 %v90
    %v158 = vpop.f32.mrf.mxu0
    %v159 = vadd.f32 %v81, %v158
    %v160 = vpop.f32.mrf.mxu0
    %161 = vdwg.mxu0
    %v162 = vmax.f32 %v159, 0.0
    %v164 = vadd.f32 %v162, %v88
    %v165 = vld [vmem:[#allocation7] sm:$0xff]
    %v166 = vld [vmem:[#allocation8] sm:$0x1]
    %v168 = vsel %vm89, %v164, 0
    %170 = vmatprep.subr.mxu0 0.0
    %171 = vmatpush1.msra.mxu0 0.0
    %172 = vmatprep.subr.mxu0 0.0
    %173 = vmatpush1.msra.mxu0 0.0
    %174 = vmatprep.subr.mxu0 0.0
    %175 = vmatpush1.msra.mxu0 0.0
    %176 = vmatprep.subr.mxu0 0.0
    %177 = vmatpush1.msra.mxu0 0.0
    %178 = vmatprep.subr.mxu0 0.0
    %179 = vmatpush1.msra.mxu0 0.0
    %180 = vmatprep.subr.mxu0 0.0
    %181 = vmatpush1.msra.mxu0 0.0
    %182 = vmatprep.subr.mxu0 0.0
    %183 = vmatpush1.msra.mxu0 0.0
    %184 = vmatprep.subr.mxu0 0.0
    %185 = vmatpush1.msra.mxu0 0.0
    %186 = vmatprep.subr.mxu0 0.0
    %187 = vmatpush1.msra.mxu0 0.0
    %188 = vmatprep.subr.mxu0 0.0
    %189 = vmatpush1.msra.mxu0 0.0
    %190 = vmatprep.subr.mxu0 0.0
    %191 = vmatpush1.msra.mxu0 0.0
    %192 = vmatprep.subr.mxu0 0.0
    %193 = vmatpush1.msra.mxu0 0.0
    %194 = vmatprep.subr.mxu0 0.0
    %195 = vmatpush1.msra.mxu0 0.0
    %196 = vmatprep.subr.mxu0 0.0
    %197 = vmatpush1.msra.mxu0 0.0
    %198 = vmatprep.subr.mxu0 0.0
    %199 = vmatpush1.msra.mxu0 0.0
    %200 = vmatprep.subr.mxu0 0.0
    %201 = vmatpush1.msra.mxu0 %v165
    %202 = vmatprep.subr.mxu0 0.0
    %203 = vmatpush2.msra.mxu0 0.0
    %204 = vmatprep.subr.mxu0 0.0
    %205 = vmatpush2.msra.mxu0 0.0
    %206 = vmatprep.subr.mxu0 0.0
    %207 = vmatpush2.msra.mxu0 0.0
    %208 = vmatprep.subr.mxu0 0.0
    %209 = vmatpush2.msra.mxu0 0.0
    %210 = vmatprep.subr.mxu0 0.0
    %211 = vmatpush2.msra.mxu0 0.0
    %212 = vmatprep.subr.mxu0 0.0
    %213 = vmatpush2.msra.mxu0 0.0
    %214 = vmatprep.subr.mxu0 0.0
    %215 = vmatpush2.msra.mxu0 0.0
    %216 = vmatprep.subr.mxu0 0.0
    %217 = vmatpush2.msra.mxu0 0.0
    %218 = vmatprep.subr.mxu0 0.0
    %219 = vmatpush2.msra.mxu0 0.0
    %220 = vmatprep.subr.mxu0 0.0
    %221 = vmatpush2.msra.mxu0 0.0
    %222 = vmatprep.subr.mxu0 0.0
    %223 = vmatpush2.msra.mxu0 0.0
    %224 = vmatprep.subr.mxu0 0.0
    %225 = vmatpush2.msra.mxu0 0.0
    %226 = vmatprep.subr.mxu0 0.0
    %227 = vmatpush2.msra.mxu0 0.0
    %228 = vmatprep.subr.mxu0 0.0
    %229 = vmatpush2.msra.mxu0 0.0
    %230 = vmatprep.subr.mxu0 0.0
    %231 = vmatpush2.msra.mxu0 0.0
    %232 = vmatprep.subr.mxu0 0.0
    %233 = vmatpush2.msra.mxu0 0.0
    %234 = vmatprep.mubr.f32.mxu0 0.0
    %235 = vmatmul.mubr.f32.gmra.mxu0 %v168
    %v236 = vpop.f32.mrf.mxu0
    %v237 = vadd.f32 %v166, %v236
    %v238 = vpop.f32.mrf.mxu0
    %239 = vdwg.mxu0
    %v240 = vmax.f32 %v237, 0.0
    %v241 = vadd.f32 %v240, %v88
    %v242 = vld [vmem:[%s5] sm:$0xff]
    %v243 = vld [vmem:[%s6] sm:$0x1]
    %v245 = vsel %vm89, %v241, 0
    %247 = vmatprep.subr.mxu0 0.0
    %248 = vmatpush1.msra.mxu0 0.0
    %249 = vmatprep.subr.mxu0 0.0
    %250 = vmatpush1.msra.mxu0 0.0
    %251 = vmatprep.subr.mxu0 0.0
    %252 = vmatpush1.msra.mxu0 0.0
    %253 = vmatprep.subr.mxu0 0.0
    %254 = vmatpush1.msra.mxu0 0.0
    %255 = vmatprep.subr.mxu0 0.0
    %256 = vmatpush1.msra.mxu0 0.0
    %257 = vmatprep.subr.mxu0 0.0
    %258 = vmatpush1.msra.mxu0 0.0
    %259 = vmatprep.subr.mxu0 0.0
    %260 = vmatpush1.msra.mxu0 0.0
    %261 = vmatprep.subr.mxu0 0.0
    %262 = vmatpush1.msra.mxu0 0.0
    %263 = vmatprep.subr.mxu0 0.0
    %264 = vmatpush1.msra.mxu0 0.0
    %265 = vmatprep.subr.mxu0 0.0
    %266 = vmatpush1.msra.mxu0 0.0
    %267 = vmatprep.subr.mxu0 0.0
    %268 = vmatpush1.msra.mxu0 0.0
    %269 = vmatprep.subr.mxu0 0.0
    %270 = vmatpush1.msra.mxu0 0.0
    %271 = vmatprep.subr.mxu0 0.0
    %272 = vmatpush1.msra.mxu0 0.0
    %273 = vmatprep.subr.mxu0 0.0
    %274 = vmatpush1.msra.mxu0 0.0
    %275 = vmatprep.subr.mxu0 0.0
    %276 = vmatpush1.msra.mxu0 0.0
    %277 = vmatprep.subr.mxu0 0.0
    %278 = vmatpush1.msra.mxu0 %v242
    %279 = vmatprep.subr.mxu0 0.0
    %280 = vmatpush2.msra.mxu0 0.0
    %281 = vmatprep.subr.mxu0 0.0
    %282 = vmatpush2.msra.mxu0 0.0
    %283 = vmatprep.subr.mxu0 0.0
    %284 = vmatpush2.msra.mxu0 0.0
    %285 = vmatprep.subr.mxu0 0.0
    %286 = vmatpush2.msra.mxu0 0.0
    %287 = vmatprep.subr.mxu0 0.0
    %288 = vmatpush2.msra.mxu0 0.0
    %289 = vmatprep.subr.mxu0 0.0
    %290 = vmatpush2.msra.mxu0 0.0
    %291 = vmatprep.subr.mxu0 0.0
    %292 = vmatpush2.msra.mxu0 0.0
    %293 = vmatprep.subr.mxu0 0.0
    %294 = vmatpush2.msra.mxu0 0.0
    %295 = vmatprep.subr.mxu0 0.0
    %296 = vmatpush2.msra.mxu0 0.0
    %297 = vmatprep.subr.mxu0 0.0
    %298 = vmatpush2.msra.mxu0 0.0
    %299 = vmatprep.subr.mxu0 0.0
    %300 = vmatpush2.msra.mxu0 0.0
    %301 = vmatprep.subr.mxu0 0.0
    %302 = vmatpush2.msra.mxu0 0.0
    %303 = vmatprep.subr.mxu0 0.0
    %304 = vmatpush2.msra.mxu0 0.0
    %305 = vmatprep.subr.mxu0 0.0
    %306 = vmatpush2.msra.mxu0 0.0
    %307 = vmatprep.subr.mxu0 0.0
    %308 = vmatpush2.msra.mxu0 0.0
    %309 = vmatprep.subr.mxu0 0.0
    %310 = vmatpush2.msra.mxu0 0.0
    %311 = vmatprep.mubr.f32.mxu0 0.0
    %312 = vmatmul.mubr.f32.gmra.mxu0 %v245
    %v313 = vpop.f32.mrf.mxu0
    %v314 = vadd.f32 %v243, %v313
    %v315 = vpop.f32.mrf.mxu0
    %316 = vdwg.mxu0
    %v317 = vmax.f32 %v314, 0.0
    %v318 = vxor.u32 %v317, 2147483648
    %v319 = vmul.f32 %v318, 1.442695
    %v320 = vpow.pop %v319
    %v321 = vadd.f32 %v320, 1.0
    %v322 = vrcp.pop %v321
    %v323 = vmul.f32 1.0, %v322
    %v324 = vlaneseq
    %v325 = vshrl.u32 %v324, 7
    %v326 = vsub.s32 0, %v325
    %v327 = vrot.slane %v323, %v326
    %329 = vbcast.lane.b32.xlu0 %v327, 256
    %v330 = vpop.permute.xlu0 %329
    %v331 = vmul.f32 %v330, %v74
    %v332 = vmul.f32 %v330, %v75
    %333 = vst [vmem:[#allocation10] sm:$0xff] %v331
    %334 = vst [vmem:[#allocation10 + $0x8] sm:$0xff] %v332
    // Predicated region
    $region46: #{tpu_custom_call.1} parent=1 // pred_check
      _
    $region47: #{tpu_custom_call.1} parent=1 // pred_check_branch
      %336 = sbr.rel (0) target = $region49
    $region48: #{tpu_custom_call.1} parent=1 // pred_region
      %s338 = ssub.s32 256, 256
      %339 = vsyncadd [#allocation4], %s338
      %s341 = sshll.u32 [#allocation10], 4
      %s342 = int_to_ptr.vmem [resolvable:$true] %s341
      %344 = dma.vmem_to_hbm [thread:$0]  %s342, 256, %s7, [#allocation4]
    $region49: #{tpu_custom_call.1} parent=1 // pred_fallthru
      _
    // Predicated region
    $region50: #{tpu_custom_call.1} parent=1 // pred_check
      _
    $region51: #{tpu_custom_call.1} parent=1 // pred_check_branch
      %346 = sbr.rel (0) target = $region53
    $region52: #{tpu_custom_call.1} parent=1 // pred_region
      %347 = dma.done [#allocation4], 256
    $region53: #{tpu_custom_call.1} parent=1 // pred_fallthru
      _
    %348 = vsyncpa [#allocation3], 1
    %349 = vsyncpa [#allocation6], 1
    %350 = vsyncpa [#allocation9], 1
    %351 = vsyncpa [#allocation4], 1

</llo_original>
